<compile_context>
chip_gen: v7x
topology: tpu7x:2x2x1
jax: 0.10.0
libtpu: 0.0.40
codegen_flags: <defaults>
</compile_context>

<pallas_src>
import functools

import jax
import jax.numpy as jnp
from jax import lax
from jax.experimental import pallas as pl
from jax.experimental.pallas import tpu as pltpu


def _round_up(v, m):
    return ((v + m - 1) // m) * m


# ----------------------------------------------------------------------------
# Kernels
# ----------------------------------------------------------------------------
def _forward_tile(x_ref, w1_ref, b1_ref, w2_ref, b2_ref, matmul_dtype):
    # Layer 1: [TM, D] x [H, D] (contract last dims) -> [TM, H] on the MXU.
    # x / w1 are fed (or cast) to `matmul_dtype` (bf16 fast path); accumulation
    # stays float32 via preferred_element_type.
    x = x_ref[...].astype(matmul_dtype)
    h1 = lax.dot_general(
        x, w1_ref[...],
        dimension_numbers=(((1,), (1,)), ((), ())),
        preferred_element_type=jnp.float32,
    )
    h1 = jnp.maximum(h1 + b1_ref[...], 0.0)          # bias + ReLU on the VPU (f32)
    # Layer 2 (output width 1), produced directly in lane-dense [1, TM] layout:
    # [1, H] x [TM, H] contracting H -> [1, TM]; f32 operands / f32 accumulate.
    pred = lax.dot_general(
        w2_ref[...], h1,
        dimension_numbers=(((1,), (1,)), ((), ())),
        preferred_element_type=jnp.float32,
    )
    return pred + b2_ref[...]                         # [1, TM] float32


def _mlp_pred_kernel(x_ref, w1_ref, b1_ref, w2_ref, b2_ref, pred_ref, *,
                     matmul_dtype):
    pred = _forward_tile(x_ref, w1_ref, b1_ref, w2_ref, b2_ref, matmul_dtype)
    pred_ref[...] = pred.astype(pred_ref.dtype)


def _mlp_loss_kernel(x_ref, y_ref, w1_ref, b1_ref, w2_ref, b2_ref,
                     pred_ref, mse_ref, mae_ref, *, batch, tile, matmul_dtype):
    i = pl.program_id(0)
    pred = _forward_tile(x_ref, w1_ref, b1_ref, w2_ref, b2_ref, matmul_dtype)
    pred_ref[...] = pred.astype(pred_ref.dtype)

    # Mask padded batch entries of the last tile out of the loss partials.
    cols = i * tile + lax.broadcasted_iota(jnp.int32, pred.shape, 1)
    diff = jnp.where(cols < batch, pred - y_ref[...], 0.0)

    # Per-tile partial sums (disjoint output blocks per grid step); the final
    # sum / batch happens outside the kernel so the grid stays fully parallel.
    mse_ref[...] = jnp.sum(diff * diff, axis=-1, keepdims=True)
    mae_ref[...] = jnp.sum(jnp.abs(diff), axis=-1, keepdims=True)


# ----------------------------------------------------------------------------
# Wrapper mirroring MLPRegression.forward(x, y=None)
# ----------------------------------------------------------------------------
def _choose_tile(B, D, H, x_itemsize, tm=None):
    if tm is None:
        # Target ~8 MiB of tile-dependent VMEM per grid step:
        #   double-buffered x + the [tile, H] f32 h1 intermediate + pred/y rows.
        per_row = 2 * D * x_itemsize + 4 * H + 64
        tile = (8 * 1024 * 1024) // max(per_row, 1)
        tile = max(256, min(4096, tile))
    else:
        tile = int(tm)
    tile = min(tile, _round_up(B, 8))
    return max(8, _round_up(tile, 8))


def mlp_regression_forward(params, x, y=None, *, tm=None,
                           matmul_dtype=jnp.bfloat16):
    """pred = Linear2(ReLU(Linear1(x))); optional fused MSE/MAE losses.

    matmul_dtype=jnp.bfloat16 (default) runs the layer-1 matmul with bf16 MXU
    inputs + float32 accumulation (fast path; small accuracy tradeoff vs the
    fp32 PyTorch module). Pass jnp.float32 for exact fp32 semantics.
    """
    w1 = jnp.asarray(params["w1"])
    b1 = jnp.asarray(params["b1"], jnp.float32).reshape(1, -1)
    w2 = jnp.asarray(params["w2"], jnp.float32).reshape(1, -1)
    b2 = jnp.asarray(params["b2"], jnp.float32).reshape(1, 1)
    H, D = w1.shape
    B, Dx = x.shape
    assert Dx == D, (Dx, D)

    tile = _choose_tile(B, D, H, x.dtype.itemsize, tm)
    B_pad = _round_up(B, tile)
    num_tiles = B_pad // tile
    grid = (num_tiles,)

    w1m = w1.astype(matmul_dtype)          # tiny; halves the VMEM-resident weight

    if B_pad != B:
        # Batch pad is unavoidable here; fuse the matmul-dtype downcast into
        # the same pass so x is rewritten at most once.
        x_in = jnp.pad(x.astype(matmul_dtype), ((0, B_pad - B), (0, 0)))
    else:
        x_in = x                            # no host-side copy; cast in-kernel

    # --- Block specs ---------------------------------------------------------
    # x keeps its true feature width D (full-array last dim -> contiguous DMA).
    x_spec = pl.BlockSpec((tile, D), lambda i: (i, 0))
    # Lane-dense pred rows: (num_tiles, tile) with (1, tile) blocks -> unmasked
    # full-width vector stores and one contiguous writeback DMA per tile.
    pred_spec = pl.BlockSpec((1, tile), lambda i: (i, 0))

    def _const_specs(single_buffered):
        kw = dict(pipeline_mode=pl.Buffered(1)) if single_buffered else {}
        return [
            pl.BlockSpec((H, D), lambda i: (0, 0), **kw),   # w1: VMEM-resident
            pl.BlockSpec((1, H), lambda i: (0, 0), **kw),   # b1
            pl.BlockSpec((1, H), lambda i: (0, 0), **kw),   # w2
            pl.BlockSpec((1, 1), lambda i: (0, 0), **kw),   # b2
        ]

    # --- VMEM budget (derived from actual buffer sizes, capped per chip) -----
    need = (2 * tile * D * x_in.dtype.itemsize       # x, double-buffered
            + 2 * H * D * w1m.dtype.itemsize         # w1 (worst case: 2 buffers)
            + 4 * tile * H                           # [tile, H] f32 h1 intermediate
            + 4 * 4 * tile                           # pred + y rows (2 buffers each)
            + 4 * (2 * H + 64))                      # biases / w2 / partials / slack
    cap = 64 * 1024 * 1024
    try:   # use the real per-core VMEM capacity when the query is available
        cap = max(32 * 1024 * 1024,
                  int(pltpu.get_tpu_info().vmem_capacity_bytes) // 2)
    except Exception:
        pass
    vmem_limit = int(min(max(2 * need, 32 * 1024 * 1024), cap))

    flops = 2 * B_pad * D * H + 2 * B_pad * H
    bytes_accessed = (x_in.size * x_in.dtype.itemsize
                      + w1m.size * w1m.dtype.itemsize
                      + (2 * H + 1) * 4 + B_pad * 2 * 4)
    cost = pl.CostEstimate(flops=flops, transcendentals=0,
                           bytes_accessed=bytes_accessed)
    cparams = pltpu.CompilerParams(dimension_semantics=("parallel",),
                                   vmem_limit_bytes=vmem_limit)

    # TODO(synk): for very large hidden sizes, add an H-chunk reduction loop so
    # the [tile, H] f32 h1 intermediate stays bounded (not needed at these sizes).

    if y is None:
        def _call_pred(single_buffered):
            kernel = functools.partial(_mlp_pred_kernel, matmul_dtype=matmul_dtype)
            return pl.pallas_call(
                kernel,
                out_shape=jax.ShapeDtypeStruct((num_tiles, tile), jnp.float32),
                grid=grid,
                in_specs=[x_spec] + _const_specs(single_buffered),
                out_specs=pred_spec,
                compiler_params=cparams,
                cost_estimate=cost,
            )(x_in, w1m, b1, w2, b2)

        try:
            pred_rows = _call_pred(True)
        except Exception:   # pl.Buffered(1) unsupported -> default double-buffering
            pred_rows = _call_pred(False)
        return pred_rows.reshape(B_pad, 1)[:B]

    y_flat = jnp.asarray(y, jnp.float32).reshape(-1)
    assert y_flat.shape[0] == B, (y_flat.shape, B)
    y_rows = jnp.pad(y_flat, (0, B_pad - B)).reshape(num_tiles, tile)
    y_spec = pl.BlockSpec((1, tile), lambda i: (i, 0))
    part_spec = pl.BlockSpec((1, 1), lambda i: (i, 0))   # per-tile loss partials

    def _call_loss(single_buffered):
        kernel = functools.partial(_mlp_loss_kernel, batch=B, tile=tile,
                                   matmul_dtype=matmul_dtype)
        return pl.pallas_call(
            kernel,
            out_shape=(
                jax.ShapeDtypeStruct((num_tiles, tile), jnp.float32),
                jax.ShapeDtypeStruct((num_tiles, 1), jnp.float32),
                jax.ShapeDtypeStruct((num_tiles, 1), jnp.float32),
            ),
            grid=grid,
            in_specs=[x_spec, y_spec] + _const_specs(single_buffered),
            out_specs=(pred_spec, part_spec, part_spec),
            compiler_params=cparams,
            cost_estimate=cost,
        )(x_in, y_rows, w1m, b1, w2, b2)

    try:
        pred_rows, mse_parts, mae_parts = _call_loss(True)
    except Exception:       # pl.Buffered(1) unsupported -> default double-buffering
        pred_rows, mse_parts, mae_parts = _call_loss(False)

    pred = pred_rows.reshape(B_pad, 1)[:B]
    inv_n = jnp.float32(1.0) / jnp.float32(B)
    mse = jnp.sum(mse_parts) * inv_n
    mae = jnp.sum(mae_parts) * inv_n
    return pred, mae, mse


def init_params(key, input_size, hidden_size):
    """Deterministic init mirroring weights_init (glorot-style normal)."""
    k1, k2 = jax.random.split(key)
    w1 = jax.random.normal(k1, (hidden_size, input_size), jnp.float32) * (
        1.0 / jnp.sqrt(jnp.float32(input_size)))
    b1 = jnp.zeros((1, hidden_size), jnp.float32)
    w2 = jax.random.normal(k2, (1, hidden_size), jnp.float32) * (
        1.0 / jnp.sqrt(jnp.float32(hidden_size)))
    b2 = jnp.zeros((1, 1), jnp.float32)
    return {"w1": w1, "b1": b1, "w2": w2, "b2": b2}


def _ref_forward(params, x, matmul_dtype=jnp.float32):
    """Plain-JAX reference at the same matmul-input precision as the kernel."""
    w1 = jnp.asarray(params["w1"]).astype(matmul_dtype)
    b1 = jnp.asarray(params["b1"], jnp.float32).reshape(1, -1)
    w2 = jnp.asarray(params["w2"], jnp.float32).reshape(1, -1)
    b2 = jnp.asarray(params["b2"], jnp.float32).reshape(1, 1)
    h1 = lax.dot_general(x.astype(matmul_dtype), w1, (((1,), (1,)), ((), ())),
                         preferred_element_type=jnp.float32,
                         precision=lax.Precision.HIGHEST)
    h1 = jnp.maximum(h1 + b1, 0.0)
    pred = lax.dot_general(h1, w2, (((1,), (1,)), ((), ())),
                           preferred_element_type=jnp.float32,
                           precision=lax.Precision.HIGHEST) + b2
    return pred


if __name__ == "__main__":
    key = jax.random.PRNGKey(0)
    kx, ky, kp, kx2, ky2, kp2 = jax.random.split(key, 6)

    # ---- Test 1: small shapes, exact fp32 path (single grid step, no pad) ---
    batch, input_size, hidden_size = 8, 32, 32
    x = jax.random.normal(kx, (batch, input_size), jnp.float32)
    y = jax.random.normal(ky, (batch, 1), jnp.float32)
    params = init_params(kp, input_size, hidden_size)

    pred = mlp_regression_forward(params, x, matmul_dtype=jnp.float32)
    pred = jax.block_until_ready(pred)

    pred2, mae, mse = mlp_regression_forward(params, x, y, matmul_dtype=jnp.float32)
    jax.block_until_ready((pred2, mae, mse))

    pred_ref = _ref_forward(params, x, jnp.float32)
    assert pred.shape == (batch, 1)
    assert jnp.allclose(pred, pred_ref, atol=1e-4, rtol=1e-3)
    assert jnp.allclose(pred2, pred_ref, atol=1e-4, rtol=1e-3)
    assert jnp.allclose(mse, jnp.mean((pred_ref - y) ** 2), atol=1e-4, rtol=1e-3)
    assert jnp.allclose(mae, jnp.mean(jnp.abs(pred_ref - y)), atol=1e-4, rtol=1e-3)

    # ---- Test 2: ragged shapes, multi-tile grid, bf16 MXU fast path ---------
    b2_, d2_, h2_ = 300, 20, 17
    x2 = jax.random.normal(kx2, (b2_, d2_), jnp.float32)
    y2 = jax.random.normal(ky2, (b2_, 1), jnp.float32)
    p2 = init_params(kp2, d2_, h2_)

    pr2, mae2, mse2 = mlp_regression_forward(p2, x2, y2, tm=128)  # grid of 3 tiles
    jax.block_until_ready((pr2, mae2, mse2))

    pr2_ref = _ref_forward(p2, x2, jnp.bfloat16)   # matched-precision reference
    assert pr2.shape == (b2_, 1)
    assert jnp.allclose(pr2, pr2_ref, atol=1e-3, rtol=1e-3)
    assert jnp.allclose(mse2, jnp.mean((pr2_ref - y2) ** 2), atol=1e-3, rtol=1e-3)
    assert jnp.allclose(mae2, jnp.mean(jnp.abs(pr2_ref - y2)), atol=1e-3, rtol=1e-3)

    print("KERNEL_OK")
</pallas_src>

<mosaic_0001>
module attributes {stable_mosaic.version = 11 : i64} {
  func.func @_mlp_pred_kernel(%arg0: i32, %arg1: memref<8x32xf32, #tpu.memory_space<vmem>>, %arg2: memref<32x32xf32, #tpu.memory_space<vmem>>, %arg3: memref<1x32xf32, #tpu.memory_space<vmem>>, %arg4: memref<1x32xf32, #tpu.memory_space<vmem>>, %arg5: memref<1x1xf32, #tpu.memory_space<vmem>>, %arg6: memref<1x8xf32, #tpu.memory_space<vmem>>) attributes {dimension_semantics = [#tpu.dimension_semantics<parallel>], iteration_bounds = array<i64: 1>, scalar_prefetch = 0 : i64, scratch_operands = 0 : i64, tpu.core_type = #tpu.core_type<tc>, window_params = [{transform_indices = @transform_0, window_bounds = array<i64: 8, 32>}, {pipeline_mode = #tpu.pipeline_mode<synchronous>, transform_indices = @transform_1, window_bounds = array<i64: 32, 32>}, {pipeline_mode = #tpu.pipeline_mode<synchronous>, transform_indices = @transform_2, window_bounds = array<i64: 1, 32>}, {pipeline_mode = #tpu.pipeline_mode<synchronous>, transform_indices = @transform_3, window_bounds = array<i64: 1, 32>}, {pipeline_mode = #tpu.pipeline_mode<synchronous>, transform_indices = @transform_4, window_bounds = array<i64: 1, 1>}, {transform_indices = @transform_5, window_bounds = array<i64: 1, 8>}]} {
    %c0 = arith.constant 0 : index
    %c0_0 = arith.constant 0 : index
    %0 = vector.load %arg1[%c0, %c0_0] : memref<8x32xf32, #tpu.memory_space<vmem>>, vector<8x32xf32>
    %c0_1 = arith.constant 0 : index
    %c0_2 = arith.constant 0 : index
    %1 = vector.load %arg2[%c0_1, %c0_2] : memref<32x32xf32, #tpu.memory_space<vmem>>, vector<32x32xf32>
    %cst = arith.constant dense<0.000000e+00> : vector<8x32xf32>
    %2 = tpu.matmul %0, %1, %cst {dimension_numbers = #tpu.dot_dimension_numbers<[1], [1], [0], [0], [0, 0, 1, 0], [], []>} : vector<8x32xf32>, vector<32x32xf32>, vector<8x32xf32> -> vector<8x32xf32>
    %c0_3 = arith.constant 0 : index
    %c0_4 = arith.constant 0 : index
    %3 = vector.load %arg3[%c0_3, %c0_4] : memref<1x32xf32, #tpu.memory_space<vmem>>, vector<1x32xf32>
    %4 = vector.broadcast %3 : vector<1x32xf32> to vector<8x32xf32>
    %5 = arith.addf %2, %4 : vector<8x32xf32>
    %cst_5 = arith.constant 0.000000e+00 : f32
    %6 = vector.broadcast %cst_5 : f32 to vector<8x32xf32>
    %7 = arith.maximumf %5, %6 : vector<8x32xf32>
    %c0_6 = arith.constant 0 : index
    %c0_7 = arith.constant 0 : index
    %8 = vector.load %arg4[%c0_6, %c0_7] : memref<1x32xf32, #tpu.memory_space<vmem>>, vector<1x32xf32>
    %cst_8 = arith.constant dense<0.000000e+00> : vector<1x8xf32>
    %9 = tpu.matmul %8, %7, %cst_8 {dimension_numbers = #tpu.dot_dimension_numbers<[1], [1], [0], [0], [0, 0, 1, 0], [], []>} : vector<1x32xf32>, vector<8x32xf32>, vector<1x8xf32> -> vector<1x8xf32>
    %c0_9 = arith.constant 0 : index
    %c0_10 = arith.constant 0 : index
    %10 = vector.load %arg5[%c0_9, %c0_10] : memref<1x1xf32, #tpu.memory_space<vmem>>, vector<1x1xf32>
    %11 = vector.broadcast %10 : vector<1x1xf32> to vector<1x8xf32>
    %12 = arith.addf %9, %11 : vector<1x8xf32>
    %c0_11 = arith.constant 0 : index
    %c0_12 = arith.constant 0 : index
    %13 = vector.load %arg6[%c0_11, %c0_12] : memref<1x8xf32, #tpu.memory_space<vmem>>, vector<1x8xf32>
    tpu.vector_store %arg6[%c0_11, %c0_12], %12 {strides = array<i32>} : memref<1x8xf32, #tpu.memory_space<vmem>>, vector<1x8xf32>,
    return
  }
  func.func @transform_0(%arg0: i32) -> (i32, i32) {
    %c0_i32 = arith.constant 0 : i32
    %c0_i32_0 = arith.constant 0 : i32
    return %arg0, %c0_i32 : i32, i32
  }
  func.func @transform_1(%arg0: i32) -> (i32, i32) {
    %c0_i32 = arith.constant 0 : i32
    %c0_i32_0 = arith.constant 0 : i32
    %c0_i32_1 = arith.constant 0 : i32
    return %c0_i32, %c0_i32_0 : i32, i32
  }
  func.func @transform_2(%arg0: i32) -> (i32, i32) {
    %c0_i32 = arith.constant 0 : i32
    %c0_i32_0 = arith.constant 0 : i32
    %c0_i32_1 = arith.constant 0 : i32
    return %c0_i32, %c0_i32_0 : i32, i32
  }
  func.func @transform_3(%arg0: i32) -> (i32, i32) {
    %c0_i32 = arith.constant 0 : i32
    %c0_i32_0 = arith.constant 0 : i32
    %c0_i32_1 = arith.constant 0 : i32
    return %c0_i32, %c0_i32_0 : i32, i32
  }
  func.func @transform_4(%arg0: i32) -> (i32, i32) {
    %c0_i32 = arith.constant 0 : i32
    %c0_i32_0 = arith.constant 0 : i32
    %c0_i32_1 = arith.constant 0 : i32
    return %c0_i32, %c0_i32_0 : i32, i32
  }
  func.func @transform_5(%arg0: i32) -> (i32, i32) {
    %c0_i32 = arith.constant 0 : i32
    %c0_i32_0 = arith.constant 0 : i32
    return %arg0, %c0_i32 : i32, i32
  }
}

module attributes {stable_mosaic.version = 11 : i64} {
  func.func @_mlp_pred_kernel(%arg0: i32, %arg1: memref<8x32xf32, #tpu.memory_space<vmem>>, %arg2: memref<32x32xf32, #tpu.memory_space<vmem>>, %arg3: memref<1x32xf32, #tpu.memory_space<vmem>>, %arg4: memref<1x32xf32, #tpu.memory_space<vmem>>, %arg5: memref<1x1xf32, #tpu.memory_space<vmem>>, %arg6: memref<1x8xf32, #tpu.memory_space<vmem>>) attributes {dimension_semantics = [#tpu.dimension_semantics<parallel>], iteration_bounds = array<i64: 1>, scalar_prefetch = 0 : i64, scratch_operands = 0 : i64, tpu.core_type = #tpu.core_type<tc>, window_params = [{transform_indices = @transform_0, window_bounds = array<i64: 8, 32>}, {pipeline_mode = #tpu.pipeline_mode<synchronous>, transform_indices = @transform_1, window_bounds = array<i64: 32, 32>}, {pipeline_mode = #tpu.pipeline_mode<synchronous>, transform_indices = @transform_2, window_bounds = array<i64: 1, 32>}, {pipeline_mode = #tpu.pipeline_mode<synchronous>, transform_indices = @transform_3, window_bounds = array<i64: 1, 32>}, {pipeline_mode = #tpu.pipeline_mode<synchronous>, transform_indices = @transform_4, window_bounds = array<i64: 1, 1>}, {transform_indices = @transform_5, window_bounds = array<i64: 1, 8>}]} {
    %c0 = arith.constant 0 : index
    %c0_0 = arith.constant 0 : index
    %0 = vector.load %arg1[%c0, %c0_0] : memref<8x32xf32, #tpu.memory_space<vmem>>, vector<8x32xf32>
    %c0_1 = arith.constant 0 : index
    %c0_2 = arith.constant 0 : index
    %1 = vector.load %arg2[%c0_1, %c0_2] : memref<32x32xf32, #tpu.memory_space<vmem>>, vector<32x32xf32>
    %cst = arith.constant dense<0.000000e+00> : vector<8x32xf32>
    %2 = tpu.matmul %0, %1, %cst {dimension_numbers = #tpu.dot_dimension_numbers<[1], [1], [0], [0], [0, 0, 1, 0], [], []>} : vector<8x32xf32>, vector<32x32xf32>, vector<8x32xf32> -> vector<8x32xf32>
    %c0_3 = arith.constant 0 : index
    %c0_4 = arith.constant 0 : index
    %3 = vector.load %arg3[%c0_3, %c0_4] : memref<1x32xf32, #tpu.memory_space<vmem>>, vector<1x32xf32>
    %4 = vector.broadcast %3 : vector<1x32xf32> to vector<8x32xf32>
    %5 = arith.addf %2, %4 : vector<8x32xf32>
    %cst_5 = arith.constant 0.000000e+00 : f32
    %6 = vector.broadcast %cst_5 : f32 to vector<8x32xf32>
    %7 = arith.maximumf %5, %6 : vector<8x32xf32>
    %c0_6 = arith.constant 0 : index
    %c0_7 = arith.constant 0 : index
    %8 = vector.load %arg4[%c0_6, %c0_7] : memref<1x32xf32, #tpu.memory_space<vmem>>, vector<1x32xf32>
    %cst_8 = arith.constant dense<0.000000e+00> : vector<1x8xf32>
    %9 = tpu.matmul %8, %7, %cst_8 {dimension_numbers = #tpu.dot_dimension_numbers<[1], [1], [0], [0], [0, 0, 1, 0], [], []>} : vector<1x32xf32>, vector<8x32xf32>, vector<1x8xf32> -> vector<1x8xf32>
    %c0_9 = arith.constant 0 : index
    %c0_10 = arith.constant 0 : index
    %10 = vector.load %arg5[%c0_9, %c0_10] : memref<1x1xf32, #tpu.memory_space<vmem>>, vector<1x1xf32>
    %11 = vector.broadcast %10 : vector<1x1xf32> to vector<1x8xf32>
    %12 = arith.addf %9, %11 : vector<1x8xf32>
    %c0_11 = arith.constant 0 : index
    %c0_12 = arith.constant 0 : index
    %13 = vector.load %arg6[%c0_11, %c0_12] : memref<1x8xf32, #tpu.memory_space<vmem>>, vector<1x8xf32>
    tpu.vector_store %arg6[%c0_11, %c0_12], %12 {strides = array<i32>} : memref<1x8xf32, #tpu.memory_space<vmem>>, vector<1x8xf32>,
    return
  }
  func.func @transform_0(%arg0: i32) -> (i32, i32) {
    %c0_i32 = arith.constant 0 : i32
    %c0_i32_0 = arith.constant 0 : i32
    return %arg0, %c0_i32 : i32, i32
  }
  func.func @transform_1(%arg0: i32) -> (i32, i32) {
    %c0_i32 = arith.constant 0 : i32
    %c0_i32_0 = arith.constant 0 : i32
    %c0_i32_1 = arith.constant 0 : i32
    return %c0_i32, %c0_i32_0 : i32, i32
  }
  func.func @transform_2(%arg0: i32) -> (i32, i32) {
    %c0_i32 = arith.constant 0 : i32
    %c0_i32_0 = arith.constant 0 : i32
    %c0_i32_1 = arith.constant 0 : i32
    return %c0_i32, %c0_i32_0 : i32, i32
  }
  func.func @transform_3(%arg0: i32) -> (i32, i32) {
    %c0_i32 = arith.constant 0 : i32
    %c0_i32_0 = arith.constant 0 : i32
    %c0_i32_1 = arith.constant 0 : i32
    return %c0_i32, %c0_i32_0 : i32, i32
  }
  func.func @transform_4(%arg0: i32) -> (i32, i32) {
    %c0_i32 = arith.constant 0 : i32
    %c0_i32_0 = arith.constant 0 : i32
    %c0_i32_1 = arith.constant 0 : i32
    return %c0_i32, %c0_i32_0 : i32, i32
  }
  func.func @transform_5(%arg0: i32) -> (i32, i32) {
    %c0_i32 = arith.constant 0 : i32
    %c0_i32_0 = arith.constant 0 : i32
    return %arg0, %c0_i32 : i32, i32
  }
}

</mosaic_0001>

<llo_original>
// kernel: tpu_custom_call.1
$region0: #{tpu_custom_call.1}
  #allocation0 [shape = 'u32[]', space=smem, size = 0x4, offset = 0x4, fixed_abs, tag = 'smem constant byte address 0x4 - core index']
  #allocation1 [shape = 'u32[144,128]{1,0:T(1,128)}', space=vmem, size = 0x12000, scoped, tag = 'internal scratch']
  #allocation2 [shape = 'f32[1,1]{1,0:T(1,128)S(1)}', space=vmem, size = 0x200, scoped, tag = 'scoped memory for tpu_custom_call.1']
  %s0 = inlined_call_operand.hbm [shape: f32[8,32], index: 0, kind: input, shape index: {}]
  %s1 = inlined_call_operand.hbm [shape: f32[32,32], index: 1, kind: input, shape index: {}]
  %s2 = inlined_call_operand.vmem [shape: f32[1,32], index: 2, kind: input, shape index: {}]
  %s3 = inlined_call_operand.vmem [shape: f32[1,32], index: 3, kind: input, shape index: {}]
  %s4 = inlined_call_operand.<no memory space> [shape: f32[1,1], index: 4, kind: input, shape index: {}]
  %s5 = inlined_call_operand.hbm [shape: f32[1,8], index: 5, kind: output, shape index: {}]
  %s6 = sld [smem:[#allocation0]]
  $region38: #{tpu_custom_call.1} parent=0
    _
  %s8 = ssub.s32 1, %s6
  %s9 = scalar_select 0, %s8, %s6
  %v10 = vstv %s4
  %11 = vst [vmem:[#allocation2] sm:$0x1] %v10
  $region1: #{tpu_custom_call.1} parent=0
    #allocation3 [shape = 'u8[4096]{0}', space=vmem, size = 0x1000, scoped, tag = 'input window, operand 0, single buffered']
    #allocation4 [shape = 's32[1]{0}', space=sflag, size = 0x4, scoped, tag = 'scoped memory for tpu_custom_call.1']
    #allocation5 [shape = 's32[1]{0}', space=sflag, size = 0x4, scoped, tag = 'scoped memory for tpu_custom_call.1']
    #allocation6 [shape = 'u8[16384]{0}', space=vmem, size = 0x4000, scoped, tag = 'input window, operand 1, single buffered']
    #allocation7 [shape = 's32[1]{0}', space=sflag, size = 0x4, scoped, tag = 'scoped memory for tpu_custom_call.1']
    #allocation8 [shape = 'u8[512]{0}', space=vmem, size = 0x400, scoped, tag = 'output window, operand 0, single buffered']
    %12 = vsyncpa [#allocation4], 0
    %13 = vsyncpa [#allocation7], 0
    %14 = vsyncpa [#allocation5], 0
    // Predicated region
    $region2: #{tpu_custom_call.1} parent=1 // pred_check
      _
    $region3: #{tpu_custom_call.1} parent=1 // pred_check_branch
      %16 = sbr.rel (0) target = $region5
    $region4: #{tpu_custom_call.1} parent=1 // pred_region
      %s18 = ssub.s32 128, 128
      %19 = vsyncadd [#allocation4], %s18
      %s21 = sshll.u32 [#allocation3], 4
      %s22 = int_to_ptr.vmem [resolvable:$true] %s21
      %24 = dma.hbm_to_vmem [thread:$0]  %s0, 128, %s22, [#allocation4]
    $region5: #{tpu_custom_call.1} parent=1 // pred_fallthru
      _
    // Predicated region
    $region6: #{tpu_custom_call.1} parent=1 // pred_check
      _
    $region7: #{tpu_custom_call.1} parent=1 // pred_check_branch
      %26 = sbr.rel (0) target = $region9
    $region8: #{tpu_custom_call.1} parent=1 // pred_region
      %s28 = ssub.s32 512, 512
      %29 = vsyncadd [#allocation7], %s28
      %s30 = sshll.u32 [#allocation6], 4
      %s31 = int_to_ptr.vmem [resolvable:$true] %s30
      %36 = dma.hbm_to_vmem [thread:$0]  %s1, 512, %s31, [#allocation7], 128, 128, 8
    $region9: #{tpu_custom_call.1} parent=1 // pred_fallthru
      _
    // Predicated region
    $region10: #{tpu_custom_call.1} parent=1 // pred_check
      _
    $region11: #{tpu_custom_call.1} parent=1 // pred_check_branch
      %38 = sbr.rel (0) target = $region13
    $region12: #{tpu_custom_call.1} parent=1 // pred_region
      _
    $region13: #{tpu_custom_call.1} parent=1 // pred_fallthru
      _
    // Predicated region
    $region14: #{tpu_custom_call.1} parent=1 // pred_check
      _
    $region15: #{tpu_custom_call.1} parent=1 // pred_check_branch
      %40 = sbr.rel (0) target = $region17
    $region16: #{tpu_custom_call.1} parent=1 // pred_region
      _
    $region17: #{tpu_custom_call.1} parent=1 // pred_fallthru
      _
    // Predicated region
    $region18: #{tpu_custom_call.1} parent=1 // pred_check
      _
    $region19: #{tpu_custom_call.1} parent=1 // pred_check_branch
      %42 = sbr.rel (0) target = $region21
    $region20: #{tpu_custom_call.1} parent=1 // pred_region
      _
    $region21: #{tpu_custom_call.1} parent=1 // pred_fallthru
      _
    // Predicated region
    $region22: #{tpu_custom_call.1} parent=1 // pred_check
      _
    $region23: #{tpu_custom_call.1} parent=1 // pred_check_branch
      %44 = sbr.rel (0) target = $region25
    $region24: #{tpu_custom_call.1} parent=1 // pred_region
      %45 = dma.done [#allocation4], 128
    $region25: #{tpu_custom_call.1} parent=1 // pred_fallthru
      _
    // Predicated region
    $region26: #{tpu_custom_call.1} parent=1 // pred_check
      _
    $region27: #{tpu_custom_call.1} parent=1 // pred_check_branch
      %47 = sbr.rel (0) target = $region29
    $region28: #{tpu_custom_call.1} parent=1 // pred_region
      %48 = dma.done [#allocation7], 512
    $region29: #{tpu_custom_call.1} parent=1 // pred_fallthru
      _
    %v49 = vld [vmem:[#allocation3] sm:$0xff]
    %v50 = vld [vmem:[#allocation6] sm:$0xff]
    %v51 = vld [vmem:[#allocation6 + $0x8] sm:$0xff]
    %v52 = vld [vmem:[#allocation6 + $0x10] sm:$0xff]
    %v53 = vld [vmem:[#allocation6 + $0x18] sm:$0xff]
    %v54 = vld [vmem:[%s2] sm:$0x1]
    %v56 = vlaneseq
    %v57 = vshrl.u32 %v56, 7
    %v58 = vsub.s32 0, %v57
    %v59 = vrot.slane %v54, %v58
    %vm61 = vcmask 261120
    %v63 = vsel %vm61, %v49, 0
    %v66 = vsel %vm61, %v50, 0
    %v69 = vsel %vm61, %v51, 0
    %v72 = vsel %vm61, %v52, 0
    %v75 = vsel %vm61, %v53, 0
    %77 = vmatprep.subr.mxu0 0.0
    %78 = vmatpush1.xpose.msra.mxu0 %v66
    %79 = vmatprep.subr.mxu0 0.0
    %80 = vmatpush1.xpose.msra.mxu0 %v69
    %81 = vmatprep.subr.mxu0 0.0
    %82 = vmatpush1.xpose.msra.mxu0 %v72
    %83 = vmatprep.subr.mxu0 0.0
    %84 = vmatpush1.xpose.msra.mxu0 %v75
    %85 = vmatprep.subr.mxu0 0.0
    %86 = vmatpush1.xpose.msra.mxu0 0.0
    %87 = vmatprep.subr.mxu0 0.0
    %88 = vmatpush1.xpose.msra.mxu0 0.0
    %89 = vmatprep.subr.mxu0 0.0
    %90 = vmatpush1.xpose.msra.mxu0 0.0
    %91 = vmatprep.subr.mxu0 0.0
    %92 = vmatpush1.xpose.msra.mxu0 0.0
    %93 = vmatprep.subr.mxu0 0.0
    %94 = vmatpush1.xpose.msra.mxu0 0.0
    %95 = vmatprep.subr.mxu0 0.0
    %96 = vmatpush1.xpose.msra.mxu0 0.0
    %97 = vmatprep.subr.mxu0 0.0
    %98 = vmatpush1.xpose.msra.mxu0 0.0
    %99 = vmatprep.subr.mxu0 0.0
    %100 = vmatpush1.xpose.msra.mxu0 0.0
    %101 = vmatprep.subr.mxu0 0.0
    %102 = vmatpush1.xpose.msra.mxu0 0.0
    %103 = vmatprep.subr.mxu0 0.0
    %104 = vmatpush1.xpose.msra.mxu0 0.0
    %105 = vmatprep.subr.mxu0 0.0
    %106 = vmatpush1.xpose.msra.mxu0 0.0
    %107 = vmatprep.subr.mxu0 0.0
    %108 = vmatpush1.xpose.msra.mxu0 0.0
    %109 = vmatprep.subr.mxu0 0.0
    %110 = vmatpush1.xpose.msra.mxu0 0.0
    %111 = vmatprep.subr.mxu0 0.0
    %112 = vmatpush1.xpose.msra.mxu0 0.0
    %113 = vmatprep.subr.mxu0 0.0
    %114 = vmatpush1.xpose.msra.mxu0 0.0
    %115 = vmatprep.subr.mxu0 0.0
    %116 = vmatpush1.xpose.msra.mxu0 0.0
    %117 = vmatprep.subr.mxu0 0.0
    %118 = vmatpush1.xpose.msra.mxu0 0.0
    %119 = vmatprep.subr.mxu0 0.0
    %120 = vmatpush1.xpose.msra.mxu0 0.0
    %121 = vmatprep.subr.mxu0 0.0
    %122 = vmatpush1.xpose.msra.mxu0 0.0
    %123 = vmatprep.subr.mxu0 0.0
    %124 = vmatpush1.xpose.msra.mxu0 0.0
    %125 = vmatprep.subr.mxu0 0.0
    %126 = vmatpush1.xpose.msra.mxu0 0.0
    %127 = vmatprep.subr.mxu0 0.0
    %128 = vmatpush1.xpose.msra.mxu0 0.0
    %129 = vmatprep.subr.mxu0 0.0
    %130 = vmatpush1.xpose.msra.mxu0 0.0
    %131 = vmatprep.subr.mxu0 0.0
    %132 = vmatpush1.xpose.msra.mxu0 0.0
    %133 = vmatprep.subr.mxu0 0.0
    %134 = vmatpush1.xpose.msra.mxu0 0.0
    %135 = vmatprep.subr.mxu0 0.0
    %136 = vmatpush1.xpose.msra.mxu0 0.0
    %137 = vmatprep.subr.mxu0 0.0
    %138 = vmatpush1.xpose.msra.mxu0 0.0
    %139 = vmatprep.subr.mxu0 0.0
    %140 = vmatpush1.xpose.msra.mxu0 0.0
    %141 = vmatprep.mubr.f32.mxu0 0.0
    %142 = vmatmul.mubr.f32.gmra.mrb[0].mxu0 %v63
    %v143 = vpop.f32.mrb[0].mxu0
    %v144 = vadd.f32 %v59, %v143
    %v145 = vpop.f32.mrb[0].mxu0
    %146 = vdwg.mxu0
    %v147 = vmax.f32 %v144, 0.0
    %v148 = vld [vmem:[%s3] sm:$0x1]
    %v149 = vld [vmem:[#allocation2] sm:$0x1]
    %151 = vset.pattern.permute.xlu0 0
    %152 = vperm.xlu0 %151, %v149
    %v153 = vpop.permute.xlu0 %152
    %v155 = vlaneseq
    %v156 = vshrl.u32 %v155, 7
    %v157 = vsub.s32 0, %v156
    %v158 = vrot.slane %v153, %v157
    %v160 = vsel %vm61, %v148, 0
    %v163 = vsel %vm61, %v147, 0
    %165 = vmatprep.subr.mxu0 0.0
    %166 = vmatpush1.xpose.msra.mxu0 %v163
    %167 = vmatprep.subr.mxu0 0.0
    %168 = vmatpush1.xpose.msra.mxu0 0.0
    %169 = vmatprep.subr.mxu0 0.0
    %170 = vmatpush1.xpose.msra.mxu0 0.0
    %171 = vmatprep.subr.mxu0 0.0
    %172 = vmatpush1.xpose.msra.mxu0 0.0
    %173 = vmatprep.subr.mxu0 0.0
    %174 = vmatpush1.xpose.msra.mxu0 0.0
    %175 = vmatprep.subr.mxu0 0.0
    %176 = vmatpush1.xpose.msra.mxu0 0.0
    %177 = vmatprep.subr.mxu0 0.0
    %178 = vmatpush1.xpose.msra.mxu0 0.0
    %179 = vmatprep.subr.mxu0 0.0
    %180 = vmatpush1.xpose.msra.mxu0 0.0
    %181 = vmatprep.subr.mxu0 0.0
    %182 = vmatpush1.xpose.msra.mxu0 0.0
    %183 = vmatprep.subr.mxu0 0.0
    %184 = vmatpush1.xpose.msra.mxu0 0.0
    %185 = vmatprep.subr.mxu0 0.0
    %186 = vmatpush1.xpose.msra.mxu0 0.0
    %187 = vmatprep.subr.mxu0 0.0
    %188 = vmatpush1.xpose.msra.mxu0 0.0
    %189 = vmatprep.subr.mxu0 0.0
    %190 = vmatpush1.xpose.msra.mxu0 0.0
    %191 = vmatprep.subr.mxu0 0.0
    %192 = vmatpush1.xpose.msra.mxu0 0.0
    %193 = vmatprep.subr.mxu0 0.0
    %194 = vmatpush1.xpose.msra.mxu0 0.0
    %195 = vmatprep.subr.mxu0 0.0
    %196 = vmatpush1.xpose.msra.mxu0 0.0
    %197 = vmatprep.subr.mxu0 0.0
    %198 = vmatpush1.xpose.msra.mxu0 0.0
    %199 = vmatprep.subr.mxu0 0.0
    %200 = vmatpush1.xpose.msra.mxu0 0.0
    %201 = vmatprep.subr.mxu0 0.0
    %202 = vmatpush1.xpose.msra.mxu0 0.0
    %203 = vmatprep.subr.mxu0 0.0
    %204 = vmatpush1.xpose.msra.mxu0 0.0
    %205 = vmatprep.subr.mxu0 0.0
    %206 = vmatpush1.xpose.msra.mxu0 0.0
    %207 = vmatprep.subr.mxu0 0.0
    %208 = vmatpush1.xpose.msra.mxu0 0.0
    %209 = vmatprep.subr.mxu0 0.0
    %210 = vmatpush1.xpose.msra.mxu0 0.0
    %211 = vmatprep.subr.mxu0 0.0
    %212 = vmatpush1.xpose.msra.mxu0 0.0
    %213 = vmatprep.subr.mxu0 0.0
    %214 = vmatpush1.xpose.msra.mxu0 0.0
    %215 = vmatprep.subr.mxu0 0.0
    %216 = vmatpush1.xpose.msra.mxu0 0.0
    %217 = vmatprep.subr.mxu0 0.0
    %218 = vmatpush1.xpose.msra.mxu0 0.0
    %219 = vmatprep.subr.mxu0 0.0
    %220 = vmatpush1.xpose.msra.mxu0 0.0
    %221 = vmatprep.subr.mxu0 0.0
    %222 = vmatpush1.xpose.msra.mxu0 0.0
    %223 = vmatprep.subr.mxu0 0.0
    %224 = vmatpush1.xpose.msra.mxu0 0.0
    %225 = vmatprep.subr.mxu0 0.0
    %226 = vmatpush1.xpose.msra.mxu0 0.0
    %227 = vmatprep.subr.mxu0 0.0
    %228 = vmatpush1.xpose.msra.mxu0 0.0
    %229 = vmatprep.mubr.f32.mxu0 0.0
    %230 = vmatmul.mubr.f32.gmra.mrb[0].mxu0 %v160
    %v231 = vpop.f32.mrb[0].mxu0
    %v232 = vadd.f32 %v158, %v231
    %v233 = vpop.f32.mrb[0].mxu0
    %234 = vdwg.mxu0
    %vm235 = vcmask 57344
    %236 = vst.msk [vmem:[#allocation8] sm:$0x1] %vm235, %v232
    // Predicated region
    $region30: #{tpu_custom_call.1} parent=1 // pred_check
      _
    $region31: #{tpu_custom_call.1} parent=1 // pred_check_branch
      %238 = sbr.rel (0) target = $region33
    $region32: #{tpu_custom_call.1} parent=1 // pred_region
      %s240 = ssub.s32 16, 16
      %241 = vsyncadd [#allocation5], %s240
      %s243 = sshll.u32 [#allocation8], 4
      %s244 = int_to_ptr.vmem [resolvable:$true] %s243
      %246 = dma.vmem_to_hbm [thread:$0]  %s244, 16, %s5, [#allocation5]
    $region33: #{tpu_custom_call.1} parent=1 // pred_fallthru
      _
    // Predicated region
    $region34: #{tpu_custom_call.1} parent=1 // pred_check
      _
    $region35: #{tpu_custom_call.1} parent=1 // pred_check_branch
      %248 = sbr.rel (0) target = $region37
    $region36: #{tpu_custom_call.1} parent=1 // pred_region
      %249 = dma.done [#allocation5], 16
    $region37: #{tpu_custom_call.1} parent=1 // pred_fallthru
      _
    %250 = vsyncpa [#allocation4], 1
    %251 = vsyncpa [#allocation7], 1
    %252 = vsyncpa [#allocation5], 1

// kernel: tpu_custom_call.1
$region0: #{tpu_custom_call.1}
  #allocation0 [shape = 'u32[]', space=smem, size = 0x4, offset = 0x4, fixed_abs, tag = 'smem constant byte address 0x4 - core index']
  #allocation1 [shape = 'u32[144,128]{1,0:T(1,128)}', space=vmem, size = 0x12000, scoped, tag = 'internal scratch']
  #allocation2 [shape = 'f32[1,1]{1,0:T(1,128)S(1)}', space=vmem, size = 0x200, scoped, tag = 'scoped memory for tpu_custom_call.1']
  %s0 = inlined_call_operand.hbm [shape: f32[8,32], index: 0, kind: input, shape index: {}]
  %s1 = inlined_call_operand.hbm [shape: f32[32,32], index: 1, kind: input, shape index: {}]
  %s2 = inlined_call_operand.vmem [shape: f32[1,32], index: 2, kind: input, shape index: {}]
  %s3 = inlined_call_operand.vmem [shape: f32[1,32], index: 3, kind: input, shape index: {}]
  %s4 = inlined_call_operand.<no memory space> [shape: f32[1,1], index: 4, kind: input, shape index: {}]
  %s5 = inlined_call_operand.hbm [shape: f32[1,8], index: 5, kind: output, shape index: {}]
  %s6 = sld [smem:[#allocation0]]
  $region38: #{tpu_custom_call.1} parent=0
    _
  %s8 = ssub.s32 1, %s6
  %s9 = scalar_select 0, %s8, %s6
  %v10 = vstv %s4
  %11 = vst [vmem:[#allocation2] sm:$0x1] %v10
  $region1: #{tpu_custom_call.1} parent=0
    #allocation3 [shape = 'u8[4096]{0}', space=vmem, size = 0x1000, scoped, tag = 'input window, operand 0, single buffered']
    #allocation4 [shape = 's32[1]{0}', space=sflag, size = 0x4, scoped, tag = 'scoped memory for tpu_custom_call.1']
    #allocation5 [shape = 's32[1]{0}', space=sflag, size = 0x4, scoped, tag = 'scoped memory for tpu_custom_call.1']
    #allocation6 [shape = 'u8[16384]{0}', space=vmem, size = 0x4000, scoped, tag = 'input window, operand 1, single buffered']
    #allocation7 [shape = 's32[1]{0}', space=sflag, size = 0x4, scoped, tag = 'scoped memory for tpu_custom_call.1']
    #allocation8 [shape = 'u8[512]{0}', space=vmem, size = 0x400, scoped, tag = 'output window, operand 0, single buffered']
    %12 = vsyncpa [#allocation4], 0
    %13 = vsyncpa [#allocation7], 0
    %14 = vsyncpa [#allocation5], 0
    // Predicated region
    $region2: #{tpu_custom_call.1} parent=1 // pred_check
      _
    $region3: #{tpu_custom_call.1} parent=1 // pred_check_branch
      %16 = sbr.rel (0) target = $region5
    $region4: #{tpu_custom_call.1} parent=1 // pred_region
      %s18 = ssub.s32 128, 128
      %19 = vsyncadd [#allocation4], %s18
      %s21 = sshll.u32 [#allocation3], 4
      %s22 = int_to_ptr.vmem [resolvable:$true] %s21
      %24 = dma.hbm_to_vmem [thread:$0]  %s0, 128, %s22, [#allocation4]
    $region5: #{tpu_custom_call.1} parent=1 // pred_fallthru
      _
    // Predicated region
    $region6: #{tpu_custom_call.1} parent=1 // pred_check
      _
    $region7: #{tpu_custom_call.1} parent=1 // pred_check_branch
      %26 = sbr.rel (0) target = $region9
    $region8: #{tpu_custom_call.1} parent=1 // pred_region
      %s28 = ssub.s32 512, 512
      %29 = vsyncadd [#allocation7], %s28
      %s30 = sshll.u32 [#allocation6], 4
      %s31 = int_to_ptr.vmem [resolvable:$true] %s30
      %36 = dma.hbm_to_vmem [thread:$0]  %s1, 512, %s31, [#allocation7], 128, 128, 8
    $region9: #{tpu_custom_call.1} parent=1 // pred_fallthru
      _
    // Predicated region
    $region10: #{tpu_custom_call.1} parent=1 // pred_check
      _
    $region11: #{tpu_custom_call.1} parent=1 // pred_check_branch
      %38 = sbr.rel (0) target = $region13
    $region12: #{tpu_custom_call.1} parent=1 // pred_region
      _
    $region13: #{tpu_custom_call.1} parent=1 // pred_fallthru
      _
    // Predicated region
    $region14: #{tpu_custom_call.1} parent=1 // pred_check
      _
    $region15: #{tpu_custom_call.1} parent=1 // pred_check_branch
      %40 = sbr.rel (0) target = $region17
    $region16: #{tpu_custom_call.1} parent=1 // pred_region
      _
    $region17: #{tpu_custom_call.1} parent=1 // pred_fallthru
      _
    // Predicated region
    $region18: #{tpu_custom_call.1} parent=1 // pred_check
      _
    $region19: #{tpu_custom_call.1} parent=1 // pred_check_branch
      %42 = sbr.rel (0) target = $region21
    $region20: #{tpu_custom_call.1} parent=1 // pred_region
      _
    $region21: #{tpu_custom_call.1} parent=1 // pred_fallthru
      _
    // Predicated region
    $region22: #{tpu_custom_call.1} parent=1 // pred_check
      _
    $region23: #{tpu_custom_call.1} parent=1 // pred_check_branch
      %44 = sbr.rel (0) target = $region25
    $region24: #{tpu_custom_call.1} parent=1 // pred_region
      %45 = dma.done [#allocation4], 128
    $region25: #{tpu_custom_call.1} parent=1 // pred_fallthru
      _
    // Predicated region
    $region26: #{tpu_custom_call.1} parent=1 // pred_check
      _
    $region27: #{tpu_custom_call.1} parent=1 // pred_check_branch
      %47 = sbr.rel (0) target = $region29
    $region28: #{tpu_custom_call.1} parent=1 // pred_region
      %48 = dma.done [#allocation7], 512
    $region29: #{tpu_custom_call.1} parent=1 // pred_fallthru
      _
    %v49 = vld [vmem:[#allocation3] sm:$0xff]
    %v50 = vld [vmem:[#allocation6] sm:$0xff]
    %v51 = vld [vmem:[#allocation6 + $0x8] sm:$0xff]
    %v52 = vld [vmem:[#allocation6 + $0x10] sm:$0xff]
    %v53 = vld [vmem:[#allocation6 + $0x18] sm:$0xff]
    %v54 = vld [vmem:[%s2] sm:$0x1]
    %v56 = vlaneseq
    %v57 = vshrl.u32 %v56, 7
    %v58 = vsub.s32 0, %v57
    %v59 = vrot.slane %v54, %v58
    %vm61 = vcmask 261120
    %v63 = vsel %vm61, %v49, 0
    %v66 = vsel %vm61, %v50, 0
    %v69 = vsel %vm61, %v51, 0
    %v72 = vsel %vm61, %v52, 0
    %v75 = vsel %vm61, %v53, 0
    %77 = vmatprep.subr.mxu0 0.0
    %78 = vmatpush1.xpose.msra.mxu0 %v66
    %79 = vmatprep.subr.mxu0 0.0
    %80 = vmatpush1.xpose.msra.mxu0 %v69
    %81 = vmatprep.subr.mxu0 0.0
    %82 = vmatpush1.xpose.msra.mxu0 %v72
    %83 = vmatprep.subr.mxu0 0.0
    %84 = vmatpush1.xpose.msra.mxu0 %v75
    %85 = vmatprep.subr.mxu0 0.0
    %86 = vmatpush1.xpose.msra.mxu0 0.0
    %87 = vmatprep.subr.mxu0 0.0
    %88 = vmatpush1.xpose.msra.mxu0 0.0
    %89 = vmatprep.subr.mxu0 0.0
    %90 = vmatpush1.xpose.msra.mxu0 0.0
    %91 = vmatprep.subr.mxu0 0.0
    %92 = vmatpush1.xpose.msra.mxu0 0.0
    %93 = vmatprep.subr.mxu0 0.0
    %94 = vmatpush1.xpose.msra.mxu0 0.0
    %95 = vmatprep.subr.mxu0 0.0
    %96 = vmatpush1.xpose.msra.mxu0 0.0
    %97 = vmatprep.subr.mxu0 0.0
    %98 = vmatpush1.xpose.msra.mxu0 0.0
    %99 = vmatprep.subr.mxu0 0.0
    %100 = vmatpush1.xpose.msra.mxu0 0.0
    %101 = vmatprep.subr.mxu0 0.0
    %102 = vmatpush1.xpose.msra.mxu0 0.0
    %103 = vmatprep.subr.mxu0 0.0
    %104 = vmatpush1.xpose.msra.mxu0 0.0
    %105 = vmatprep.subr.mxu0 0.0
    %106 = vmatpush1.xpose.msra.mxu0 0.0
    %107 = vmatprep.subr.mxu0 0.0
    %108 = vmatpush1.xpose.msra.mxu0 0.0
    %109 = vmatprep.subr.mxu0 0.0
    %110 = vmatpush1.xpose.msra.mxu0 0.0
    %111 = vmatprep.subr.mxu0 0.0
    %112 = vmatpush1.xpose.msra.mxu0 0.0
    %113 = vmatprep.subr.mxu0 0.0
    %114 = vmatpush1.xpose.msra.mxu0 0.0
    %115 = vmatprep.subr.mxu0 0.0
    %116 = vmatpush1.xpose.msra.mxu0 0.0
    %117 = vmatprep.subr.mxu0 0.0
    %118 = vmatpush1.xpose.msra.mxu0 0.0
    %119 = vmatprep.subr.mxu0 0.0
    %120 = vmatpush1.xpose.msra.mxu0 0.0
    %121 = vmatprep.subr.mxu0 0.0
    %122 = vmatpush1.xpose.msra.mxu0 0.0
    %123 = vmatprep.subr.mxu0 0.0
    %124 = vmatpush1.xpose.msra.mxu0 0.0
    %125 = vmatprep.subr.mxu0 0.0
    %126 = vmatpush1.xpose.msra.mxu0 0.0
    %127 = vmatprep.subr.mxu0 0.0
    %128 = vmatpush1.xpose.msra.mxu0 0.0
    %129 = vmatprep.subr.mxu0 0.0
    %130 = vmatpush1.xpose.msra.mxu0 0.0
    %131 = vmatprep.subr.mxu0 0.0
    %132 = vmatpush1.xpose.msra.mxu0 0.0
    %133 = vmatprep.subr.mxu0 0.0
    %134 = vmatpush1.xpose.msra.mxu0 0.0
    %135 = vmatprep.subr.mxu0 0.0
    %136 = vmatpush1.xpose.msra.mxu0 0.0
    %137 = vmatprep.subr.mxu0 0.0
    %138 = vmatpush1.xpose.msra.mxu0 0.0
    %139 = vmatprep.subr.mxu0 0.0
    %140 = vmatpush1.xpose.msra.mxu0 0.0
    %141 = vmatprep.mubr.f32.mxu0 0.0
    %142 = vmatmul.mubr.f32.gmra.mrb[0].mxu0 %v63
    %v143 = vpop.f32.mrb[0].mxu0
    %v144 = vadd.f32 %v59, %v143
    %v145 = vpop.f32.mrb[0].mxu0
    %146 = vdwg.mxu0
    %v147 = vmax.f32 %v144, 0.0
    %v148 = vld [vmem:[%s3] sm:$0x1]
    %v149 = vld [vmem:[#allocation2] sm:$0x1]
    %151 = vset.pattern.permute.xlu0 0
    %152 = vperm.xlu0 %151, %v149
    %v153 = vpop.permute.xlu0 %152
    %v155 = vlaneseq
    %v156 = vshrl.u32 %v155, 7
    %v157 = vsub.s32 0, %v156
    %v158 = vrot.slane %v153, %v157
    %v160 = vsel %vm61, %v148, 0
    %v163 = vsel %vm61, %v147, 0
    %165 = vmatprep.subr.mxu0 0.0
    %166 = vmatpush1.xpose.msra.mxu0 %v163
    %167 = vmatprep.subr.mxu0 0.0
    %168 = vmatpush1.xpose.msra.mxu0 0.0
    %169 = vmatprep.subr.mxu0 0.0
    %170 = vmatpush1.xpose.msra.mxu0 0.0
    %171 = vmatprep.subr.mxu0 0.0
    %172 = vmatpush1.xpose.msra.mxu0 0.0
    %173 = vmatprep.subr.mxu0 0.0
    %174 = vmatpush1.xpose.msra.mxu0 0.0
    %175 = vmatprep.subr.mxu0 0.0
    %176 = vmatpush1.xpose.msra.mxu0 0.0
    %177 = vmatprep.subr.mxu0 0.0
    %178 = vmatpush1.xpose.msra.mxu0 0.0
    %179 = vmatprep.subr.mxu0 0.0
    %180 = vmatpush1.xpose.msra.mxu0 0.0
    %181 = vmatprep.subr.mxu0 0.0
    %182 = vmatpush1.xpose.msra.mxu0 0.0
    %183 = vmatprep.subr.mxu0 0.0
    %184 = vmatpush1.xpose.msra.mxu0 0.0
    %185 = vmatprep.subr.mxu0 0.0
    %186 = vmatpush1.xpose.msra.mxu0 0.0
    %187 = vmatprep.subr.mxu0 0.0
    %188 = vmatpush1.xpose.msra.mxu0 0.0
    %189 = vmatprep.subr.mxu0 0.0
    %190 = vmatpush1.xpose.msra.mxu0 0.0
    %191 = vmatprep.subr.mxu0 0.0
    %192 = vmatpush1.xpose.msra.mxu0 0.0
    %193 = vmatprep.subr.mxu0 0.0
    %194 = vmatpush1.xpose.msra.mxu0 0.0
    %195 = vmatprep.subr.mxu0 0.0
    %196 = vmatpush1.xpose.msra.mxu0 0.0
    %197 = vmatprep.subr.mxu0 0.0
    %198 = vmatpush1.xpose.msra.mxu0 0.0
    %199 = vmatprep.subr.mxu0 0.0
    %200 = vmatpush1.xpose.msra.mxu0 0.0
    %201 = vmatprep.subr.mxu0 0.0
    %202 = vmatpush1.xpose.msra.mxu0 0.0
    %203 = vmatprep.subr.mxu0 0.0
    %204 = vmatpush1.xpose.msra.mxu0 0.0
    %205 = vmatprep.subr.mxu0 0.0
    %206 = vmatpush1.xpose.msra.mxu0 0.0
    %207 = vmatprep.subr.mxu0 0.0
    %208 = vmatpush1.xpose.msra.mxu0 0.0
    %209 = vmatprep.subr.mxu0 0.0
    %210 = vmatpush1.xpose.msra.mxu0 0.0
    %211 = vmatprep.subr.mxu0 0.0
    %212 = vmatpush1.xpose.msra.mxu0 0.0
    %213 = vmatprep.subr.mxu0 0.0
    %214 = vmatpush1.xpose.msra.mxu0 0.0
    %215 = vmatprep.subr.mxu0 0.0
    %216 = vmatpush1.xpose.msra.mxu0 0.0
    %217 = vmatprep.subr.mxu0 0.0
    %218 = vmatpush1.xpose.msra.mxu0 0.0
    %219 = vmatprep.subr.mxu0 0.0
    %220 = vmatpush1.xpose.msra.mxu0 0.0
    %221 = vmatprep.subr.mxu0 0.0
    %222 = vmatpush1.xpose.msra.mxu0 0.0
    %223 = vmatprep.subr.mxu0 0.0
    %224 = vmatpush1.xpose.msra.mxu0 0.0
    %225 = vmatprep.subr.mxu0 0.0
    %226 = vmatpush1.xpose.msra.mxu0 0.0
    %227 = vmatprep.subr.mxu0 0.0
    %228 = vmatpush1.xpose.msra.mxu0 0.0
    %229 = vmatprep.mubr.f32.mxu0 0.0
    %230 = vmatmul.mubr.f32.gmra.mrb[0].mxu0 %v160
    %v231 = vpop.f32.mrb[0].mxu0
    %v232 = vadd.f32 %v158, %v231
    %v233 = vpop.f32.mrb[0].mxu0
    %234 = vdwg.mxu0
    %vm235 = vcmask 57344
    %236 = vst.msk [vmem:[#allocation8] sm:$0x1] %vm235, %v232
    // Predicated region
    $region30: #{tpu_custom_call.1} parent=1 // pred_check
      _
    $region31: #{tpu_custom_call.1} parent=1 // pred_check_branch
      %238 = sbr.rel (0) target = $region33
    $region32: #{tpu_custom_call.1} parent=1 // pred_region
      %s240 = ssub.s32 16, 16
      %241 = vsyncadd [#allocation5], %s240
      %s243 = sshll.u32 [#allocation8], 4
      %s244 = int_to_ptr.vmem [resolvable:$true] %s243
      %246 = dma.vmem_to_hbm [thread:$0]  %s244, 16, %s5, [#allocation5]
    $region33: #{tpu_custom_call.1} parent=1 // pred_fallthru
      _
    // Predicated region
    $region34: #{tpu_custom_call.1} parent=1 // pred_check
      _
    $region35: #{tpu_custom_call.1} parent=1 // pred_check_branch
      %248 = sbr.rel (0) target = $region37
    $region36: #{tpu_custom_call.1} parent=1 // pred_region
      %249 = dma.done [#allocation5], 16
    $region37: #{tpu_custom_call.1} parent=1 // pred_fallthru
      _
    %250 = vsyncpa [#allocation4], 1
    %251 = vsyncpa [#allocation7], 1
    %252 = vsyncpa [#allocation5], 1

</llo_original>
